<compile_context>
chip_gen: v7x
topology: tpu7x:2x2x1
jax: 0.10.0
libtpu: 0.0.40
codegen_flags: <defaults>
</compile_context>

<pallas_src>
import functools

import jax
import jax.numpy as jnp
from jax.experimental import pallas as pl
from jax.experimental.pallas import tpu as pltpu


def _round_up(x, m):
    return ((x + m - 1) // m) * m


def _largest_tile(dim_padded, cap):
    """Largest multiple of 128 that divides `dim_padded` and is <= cap.

    `dim_padded` is already a multiple of 128, so 128 always qualifies and no
    padding beyond 128-alignment is ever introduced by the tile choice.
    """
    best = 128
    t = 256
    while t <= min(dim_padded, cap):
        if dim_padded % t == 0:
            best = t
        t += 128
    return best


def _mm_bias_relu_acc_kernel(x_ref, w_ref, b_ref, o_ref, acc_ref):
    """Multi-K-step path: grid = (M tiles, Cout tiles, K tiles), K last."""
    @pl.when(pl.program_id(2) == 0)
    def _init():
        acc_ref[...] = jnp.zeros_like(acc_ref)

    acc_ref[...] += jnp.dot(x_ref[...], w_ref[...],
                            preferred_element_type=jnp.float32)

    @pl.when(pl.program_id(2) == pl.num_programs(2) - 1)
    def _finalize():
        out = acc_ref[...] + b_ref[...]                    # (TM,TN) + (1,TN)
        o_ref[...] = jnp.maximum(out, 0.0).astype(o_ref.dtype)


def _mm_bias_relu_1k_kernel(x_ref, w_ref, b_ref, o_ref):
    """Single-K-step fast path: no scratch accumulator, 2D all-parallel grid."""
    acc = jnp.dot(x_ref[...], w_ref[...], preferred_element_type=jnp.float32)
    o_ref[...] = jnp.maximum(acc + b_ref[...], 0.0).astype(o_ref.dtype)


def convolution_forward(x_nchw, weight_oihw, bias, *, matmul_dtype=jnp.bfloat16):
    """Forward of the PyTorch `Convolution` module: relu(conv2d(x, w, b)).

    conv2d: kernel 3x3, stride 1, padding 1, NCHW layout (PyTorch semantics).
    MXU operands are cast to `matmul_dtype` (default bf16, f32 accumulation);
    pass matmul_dtype=jnp.float32 for exact f32 parity.
    """
    n, cin, h, wdt = x_nchw.shape
    cout = weight_oihw.shape[0]
    out_dtype = x_nchw.dtype

    # ---- one-shot layout plumbing (outside the hot loop) --------------------
    # NCHW -> NHWC, zero-pad H/W by 1, build the im2col slab:
    #   x_col[n*H*W + h*W + w, (kh*3 + kw)*Cin + ci] = x_pad[n, h+kh, w+kw, ci]
    x_nhwc = jnp.transpose(x_nchw, (0, 2, 3, 1))
    x_pad = jnp.pad(x_nhwc, ((0, 0), (1, 1), (1, 1), (0, 0)))
    taps = [x_pad[:, kh:kh + h, kw:kw + wdt, :]
            for kh in range(3) for kw in range(3)]
    x_col = jnp.concatenate(taps, axis=-1).reshape(n * h * wdt, 9 * cin)

    # OIHW -> (KH, KW, Cin, Cout) -> (9*Cin, Cout); same (kh, kw, ci) order.
    w_mat = jnp.transpose(weight_oihw, (2, 3, 1, 0)).reshape(9 * cin, cout)

    m, k = x_col.shape

    # ---- lane-dense tiling: 128-aligned padding only, tiles divide exactly ---
    mp = _round_up(m, 128)
    kp = _round_up(k, 128)
    np_ = _round_up(cout, 128)

    tm = _largest_tile(mp, 1024)
    tk = _largest_tile(kp, 512)
    tn = _largest_tile(np_, 512)

    # v7x megacore: avoid a 1x1 "parallel" grid when the problem allows it.
    if (mp // tm) * (np_ // tn) == 1 and mp >= 256:
        tm = tm // 2 if (tm // 2) % 128 == 0 else 128

    if matmul_dtype is not None:
        x_col = x_col.astype(matmul_dtype)
        w_mat = w_mat.astype(matmul_dtype)

    x_col = jnp.pad(x_col, ((0, mp - m), (0, kp - k)))
    w_mat = jnp.pad(w_mat, ((0, kp - k), (0, np_ - cout)))
    b_mat = jnp.pad(bias.astype(jnp.float32), (0, np_ - cout)).reshape(1, np_)

    n_k = kp // tk
    in_elt = jnp.dtype(x_col.dtype).itemsize
    out_elt = jnp.dtype(out_dtype).itemsize

    # Cost estimate on the *padded* problem (what the kernel actually runs).
    cost = pl.CostEstimate(
        flops=2 * mp * kp * np_ + 2 * mp * np_,
        transcendentals=0,
        bytes_accessed=(mp * kp * in_elt + kp * np_ * in_elt
                        + np_ * 4 + mp * np_ * out_elt),
    )

    # VMEM budget: double-buffered x/w/bias/out blocks (+ f32 scratch acc if
    # multi-K), capped per-generation (v7x has 64 MiB VMEM, v5e/v6e 128 MiB).
    vmem_bytes = (2 * (tm * tk + tk * tn) * in_elt
                  + 2 * tn * 4
                  + 2 * tm * tn * out_elt
                  + (tm * tn * 4 if n_k > 1 else 0)
                  + (2 << 20))
    try:
        vmem_cap = getattr(pltpu.get_tpu_info(), "vmem_capacity_bytes", None)
    except Exception:  # pragma: no cover - defensive; query is trace-time only
        vmem_cap = None
    if not vmem_cap:
        vmem_cap = 128 << 20
    vmem_ceiling = min(int(vmem_cap) * 5 // 8, 96 << 20)   # ~40 MiB on v7x, ~80 MiB on v5e/v6e
    vmem_limit = int(min(max(vmem_bytes, 16 << 20), vmem_ceiling))

    if n_k == 1:
        # Single-K-step fast path: 2D all-parallel grid, no scratch accumulator.
        grid = (mp // tm, np_ // tn)
        out_padded = pl.pallas_call(
            _mm_bias_relu_1k_kernel,
            out_shape=jax.ShapeDtypeStruct((mp, np_), out_dtype),
            grid_spec=pltpu.PrefetchScalarGridSpec(
                num_scalar_prefetch=0,
                grid=grid,
                in_specs=[
                    pl.BlockSpec((tm, tk), lambda i, j: (i, 0)),   # im2col rows
                    pl.BlockSpec((tk, tn), lambda i, j: (0, j)),   # weights
                    pl.BlockSpec((1, tn), lambda i, j: (0, j)),    # bias
                ],
                out_specs=pl.BlockSpec((tm, tn), lambda i, j: (i, j)),
            ),
            compiler_params=pltpu.CompilerParams(
                dimension_semantics=("parallel", "parallel"),
                vmem_limit_bytes=vmem_limit,
            ),
            cost_estimate=cost,
        )(x_col, w_mat, b_mat)
    else:
        grid = (mp // tm, np_ // tn, n_k)
        out_padded = pl.pallas_call(
            _mm_bias_relu_acc_kernel,
            out_shape=jax.ShapeDtypeStruct((mp, np_), out_dtype),
            grid_spec=pltpu.PrefetchScalarGridSpec(
                num_scalar_prefetch=0,
                grid=grid,
                in_specs=[
                    pl.BlockSpec((tm, tk), lambda i, j, kk: (i, kk)),   # im2col rows
                    pl.BlockSpec((tk, tn), lambda i, j, kk: (kk, j)),   # weights
                    pl.BlockSpec((1, tn), lambda i, j, kk: (0, j)),     # bias
                ],
                out_specs=pl.BlockSpec((tm, tn), lambda i, j, kk: (i, j)),
                scratch_shapes=[pltpu.VMEM((tm, tn), jnp.float32)],
            ),
            compiler_params=pltpu.CompilerParams(
                dimension_semantics=("parallel", "parallel", "arbitrary"),
                vmem_limit_bytes=vmem_limit,
            ),
            cost_estimate=cost,
        )(x_col, w_mat, b_mat)

    # Crop the channel / row padding, back to NCHW.
    out = out_padded[:m, :cout].reshape(n, h, wdt, cout)
    return jnp.transpose(out, (0, 3, 1, 2))


def init_params(key, c_in, c_out):
    """Deterministic params matching nn.Conv2d(c_in, c_out, 3) shapes/init style."""
    k_w, k_b = jax.random.split(key)
    fan_in = c_in * 3 * 3
    bound = 1.0 / jnp.sqrt(fan_in)
    weight = jax.random.uniform(k_w, (c_out, c_in, 3, 3), jnp.float32,
                                minval=-bound, maxval=bound)
    bias = jax.random.uniform(k_b, (c_out,), jnp.float32,
                              minval=-bound, maxval=bound)
    return weight, bias


def _reference(x, weight, bias):
    out = jax.lax.conv_general_dilated(
        x, weight, window_strides=(1, 1), padding=((1, 1), (1, 1)),
        dimension_numbers=("NCHW", "OIHW", "NCHW"))
    return jnp.maximum(out + bias[None, :, None, None], 0.0)


if __name__ == "__main__":
    key = jax.random.PRNGKey(0)
    k_x, k_p, k_x2, k_p2 = jax.random.split(key, 4)

    # Case 1: small demo shapes; exercises the single-K-step fast path with
    # the default bf16 MXU operands (f32 accumulation).
    N, C_IN, C_OUT, H, W = 2, 4, 8, 16, 16
    x = jax.random.normal(k_x, (N, C_IN, H, W), jnp.float32)
    weight, bias = init_params(k_p, C_IN, C_OUT)

    out = jax.block_until_ready(jax.jit(convolution_forward)(x, weight, bias))
    ref = _reference(x, weight, bias)
    assert out.shape == (N, C_OUT, H, W)
    err = float(jnp.max(jnp.abs(out - ref)))
    assert err < 3e-2, "bf16 path max abs err = %f" % err

    # Case 2: Cin=64 (k=576 > 512) exercises the multi-K-step accumulator
    # path, run with f32 MXU operands.
    N2, C_IN2, C_OUT2, H2, W2 = 1, 64, 16, 8, 8
    x2 = jax.random.normal(k_x2, (N2, C_IN2, H2, W2), jnp.float32)
    w2, b2 = init_params(k_p2, C_IN2, C_OUT2)
    fwd_f32 = jax.jit(functools.partial(convolution_forward,
                                        matmul_dtype=jnp.float32))
    out2 = jax.block_until_ready(fwd_f32(x2, w2, b2))
    ref2 = _reference(x2, w2, b2)
    assert out2.shape == (N2, C_OUT2, H2, W2)
    err2 = float(jnp.max(jnp.abs(out2 - ref2)))
    assert err2 < 3e-2, "f32 path max abs err = %f" % err2

    print("KERNEL_OK")
</pallas_src>

<mosaic_0001>
module attributes {stable_mosaic.version = 11 : i64} {
  func.func @_mm_bias_relu_1k_kernel(%arg0: i32, %arg1: i32, %arg2: memref<256x128xbf16, #tpu.memory_space<vmem>>, %arg3: memref<128x128xbf16, #tpu.memory_space<vmem>>, %arg4: memref<1x128xf32, #tpu.memory_space<vmem>>, %arg5: memref<256x128xf32, #tpu.memory_space<vmem>>) attributes {dimension_semantics = [#tpu.dimension_semantics<parallel>, #tpu.dimension_semantics<parallel>], iteration_bounds = array<i64: 2, 1>, scalar_prefetch = 0 : i64, scratch_operands = 0 : i64, tpu.core_type = #tpu.core_type<tc>, window_params = [{transform_indices = @transform_0, window_bounds = array<i64: 256, 128>}, {transform_indices = @transform_1, window_bounds = array<i64: 128, 128>}, {transform_indices = @transform_2, window_bounds = array<i64: 1, 128>}, {transform_indices = @transform_3, window_bounds = array<i64: 256, 128>}]} {
    %c0 = arith.constant 0 : index
    %c0_0 = arith.constant 0 : index
    %0 = vector.load %arg2[%c0, %c0_0] : memref<256x128xbf16, #tpu.memory_space<vmem>>, vector<256x128xbf16>
    %c0_1 = arith.constant 0 : index
    %c0_2 = arith.constant 0 : index
    %1 = vector.load %arg3[%c0_1, %c0_2] : memref<128x128xbf16, #tpu.memory_space<vmem>>, vector<128x128xbf16>
    %cst = arith.constant dense<0.000000e+00> : vector<256x128xf32>
    %2 = tpu.matmul %0, %1, %cst {dimension_numbers = #tpu.dot_dimension_numbers<[1], [0], [0], [1], [0, 0, 1, 1], [], []>} : vector<256x128xbf16>, vector<128x128xbf16>, vector<256x128xf32> -> vector<256x128xf32>
    %c0_3 = arith.constant 0 : index
    %c0_4 = arith.constant 0 : index
    %3 = vector.load %arg4[%c0_3, %c0_4] : memref<1x128xf32, #tpu.memory_space<vmem>>, vector<1x128xf32>
    %4 = vector.broadcast %3 : vector<1x128xf32> to vector<256x128xf32>
    %5 = arith.addf %2, %4 : vector<256x128xf32>
    %cst_5 = arith.constant 0.000000e+00 : f32
    %6 = vector.broadcast %cst_5 : f32 to vector<256x128xf32>
    %7 = arith.maximumf %5, %6 : vector<256x128xf32>
    %c0_6 = arith.constant 0 : index
    %c0_7 = arith.constant 0 : index
    %8 = vector.load %arg5[%c0_6, %c0_7] : memref<256x128xf32, #tpu.memory_space<vmem>>, vector<256x128xf32>
    tpu.vector_store %arg5[%c0_6, %c0_7], %7 {strides = array<i32>} : memref<256x128xf32, #tpu.memory_space<vmem>>, vector<256x128xf32>,
    return
  }
  func.func @transform_0(%arg0: i32, %arg1: i32) -> (i32, i32) {
    %c0_i32 = arith.constant 0 : i32
    %c0_i32_0 = arith.constant 0 : i32
    return %arg0, %c0_i32 : i32, i32
  }
  func.func @transform_1(%arg0: i32, %arg1: i32) -> (i32, i32) {
    %c0_i32 = arith.constant 0 : i32
    %c0_i32_0 = arith.constant 0 : i32
    return %c0_i32, %arg1 : i32, i32
  }
  func.func @transform_2(%arg0: i32, %arg1: i32) -> (i32, i32) {
    %c0_i32 = arith.constant 0 : i32
    %c0_i32_0 = arith.constant 0 : i32
    return %c0_i32, %arg1 : i32, i32
  }
  func.func @transform_3(%arg0: i32, %arg1: i32) -> (i32, i32) {
    %c0_i32 = arith.constant 0 : i32
    return %arg0, %arg1 : i32, i32
  }
}

</mosaic_0001>

<llo_original>
// kernel: convolution_forward.1
$region0: #{convolution_forward.1}
  #allocation0 [shape = 'u32[]', space=smem, size = 0x4, offset = 0x4, fixed_abs, tag = 'smem constant byte address 0x4 - core index']
  #allocation1 [shape = 'u32[144,128]{1,0:T(1,128)}', space=vmem, size = 0x12000, scoped, tag = 'internal scratch']
  %s0 = inlined_call_operand.vmem [shape: bf16[512,128], index: 0, kind: input, shape index: {}]
  %s1 = inlined_call_operand.vmem [shape: bf16[128,128], index: 1, kind: input, shape index: {}]
  %s2 = inlined_call_operand.vmem [shape: f32[1,128], index: 2, kind: input, shape index: {}]
  %s3 = inlined_call_operand.vmem [shape: f32[512,128], index: 3, kind: output, shape index: {}]
  %s4 = sld [smem:[#allocation0]]
  $region45: #{convolution_forward.1} parent=0
    _
  %s6 = ssub.s32 1, %s4
  %s7 = scalar_select 0, %s6, %s4
  loop: start=0, step=1, limit=4
  $region2: #{convolution_forward.1} parent=0 // loop_pre_header
    _
  $region3: #{convolution_forward.1} parent=0 // loop_header
    %s9 = sphi 0, %s13
    %p10 = scmp.ge.s32.totalorder %s9, 4
    %s16 = sphi 0, %s28
    %s17 = sphi 0, %s24
    %s18 = sphi 0, %s16
    %s19 = sphi 0, %s17
    %s20 = sphi 0, %s18
    %s21 = sphi 0, %s19
    %s31 = sphi 0, %s33
    %s34 = sphi 0, %s31
    %s35 = sphi 0, %s34
    %s51 = sphi 0, %s35
    %s57 = sphi 0, %s59
    %s60 = sphi 0, %s57
    %s61 = sphi 0, %s60
    %s77 = sphi 0, %s61
    %s83 = sphi 0, %s85
    %s86 = sphi 0, %s83
    %s87 = sphi 0, %s86
    %s103 = sphi 0, %s87
    %s111 = sphi 0, %s113
    %s114 = sphi 0, %s111
    %s115 = sphi 0, %s114
    %s131 = sphi 0, %s115
  $region4: #{convolution_forward.1} parent=0 // loop_header_branch
    %12 = sbr.rel (%p10) target = $region8
  $region5: #{convolution_forward.1} parent=0 // loop_body
    %s14 = ssub.s32 %s9, 1
    %s15 = ssub.s32 %s9, 2
    %s22 = sadd.s32 1, %s17
    %p23 = scmp.ge.s32.totalorder %s22, 1
    %s24 = scalar_select %p23, 0, %s22
    %s25 = sadd.s32 1, %s16
    %s26 = scalar_select %p23, %s25, %s16
    %p27 = scmp.ge.s32.totalorder %s26, 2
    %s28 = scalar_select %p27, 0, %s26
    %s29 = ssub.s32 %s16, %s28
    %p30 = scmp.eq.s32.totalorder %s29, 0
    %s32 = sadd.s32 %s31, 1
    %s33 = scalar_select %p30, %s31, %s32
    %p36 = pneg %p30
    %p37 = scmp.eq.s32.totalorder %s9, 1
    %p38 = por %p36, %p37
    %p39 = scmp.ne.s32.totalorder %s31, %s34
    %p40 = scmp.eq.s32.totalorder %s9, 0
    %p41 = por %p39, %p40
    %p42 = scmp.ne.s32.totalorder %s31, %s34
    %p43 = scmp.eq.s32.totalorder %s14, 1
    %p44 = por %p42, %p43
    %p45 = scmp.ne.s32.totalorder %s34, %s35
    %p46 = scmp.eq.s32.totalorder %s14, 0
    %p47 = por %p45, %p46
    %p48 = scmp.ne.s32.totalorder %s34, %s35
    %p49 = scmp.eq.s32.totalorder %s15, 1
    %p50 = por %p48, %p49
    %p52 = scmp.ne.s32.totalorder %s35, %s51
    %p53 = scmp.eq.s32.totalorder %s15, 0
    %p54 = por %p52, %p53
    %s55 = ssub.s32 %s17, %s24
    %p56 = scmp.eq.s32.totalorder %s55, 0
    %s58 = sadd.s32 %s57, 1
    %s59 = scalar_select %p56, %s57, %s58
    %p62 = pneg %p56
    %p63 = scmp.eq.s32.totalorder %s9, 1
    %p64 = por %p62, %p63
    %p65 = scmp.ne.s32.totalorder %s57, %s60
    %p66 = scmp.eq.s32.totalorder %s9, 0
    %p67 = por %p65, %p66
    %p68 = scmp.ne.s32.totalorder %s57, %s60
    %p69 = scmp.eq.s32.totalorder %s14, 1
    %p70 = por %p68, %p69
    %p71 = scmp.ne.s32.totalorder %s60, %s61
    %p72 = scmp.eq.s32.totalorder %s14, 0
    %p73 = por %p71, %p72
    %p74 = scmp.ne.s32.totalorder %s60, %s61
    %p75 = scmp.eq.s32.totalorder %s15, 1
    %p76 = por %p74, %p75
    %p78 = scmp.ne.s32.totalorder %s61, %s77
    %p79 = scmp.eq.s32.totalorder %s15, 0
    %p80 = por %p78, %p79
    %s81 = ssub.s32 %s17, %s24
    %p82 = scmp.eq.s32.totalorder %s81, 0
    %s84 = sadd.s32 %s83, 1
    %s85 = scalar_select %p82, %s83, %s84
    %p88 = pneg %p82
    %p89 = scmp.eq.s32.totalorder %s9, 1
    %p90 = por %p88, %p89
    %p91 = scmp.ne.s32.totalorder %s83, %s86
    %p92 = scmp.eq.s32.totalorder %s9, 0
    %p93 = por %p91, %p92
    %p94 = scmp.ne.s32.totalorder %s83, %s86
    %p95 = scmp.eq.s32.totalorder %s14, 1
    %p96 = por %p94, %p95
    %p97 = scmp.ne.s32.totalorder %s86, %s87
    %p98 = scmp.eq.s32.totalorder %s14, 0
    %p99 = por %p97, %p98
    %p100 = scmp.ne.s32.totalorder %s86, %s87
    %p101 = scmp.eq.s32.totalorder %s15, 1
    %p102 = por %p100, %p101
    %p104 = scmp.ne.s32.totalorder %s87, %s103
    %p105 = scmp.eq.s32.totalorder %s15, 0
    %p106 = por %p104, %p105
    %s107 = ssub.s32 %s16, %s28
    %s108 = ssub.s32 %s17, %s24
    %s109 = sor.u32 %s107, %s108
    %p110 = scmp.eq.s32.totalorder %s109, 0
    %s112 = sadd.s32 %s111, 1
    %s113 = scalar_select %p110, %s111, %s112
    %p116 = pneg %p110
    %p117 = scmp.eq.s32.totalorder %s9, 1
    %p118 = por %p116, %p117
    %p119 = scmp.ne.s32.totalorder %s111, %s114
    %p120 = scmp.eq.s32.totalorder %s9, 0
    %p121 = por %p119, %p120
    %p122 = scmp.ne.s32.totalorder %s111, %s114
    %p123 = scmp.eq.s32.totalorder %s14, 1
    %p124 = por %p122, %p123
    %p125 = scmp.ne.s32.totalorder %s114, %s115
    %p126 = scmp.eq.s32.totalorder %s14, 0
    %p127 = por %p125, %p126
    %p128 = scmp.ne.s32.totalorder %s114, %s115
    %p129 = scmp.eq.s32.totalorder %s15, 1
    %p130 = por %p128, %p129
    %p132 = scmp.ne.s32.totalorder %s115, %s131
    %p133 = scmp.eq.s32.totalorder %s15, 0
    %p134 = por %p132, %p133
    %p135 = scmp.le.s32.totalorder 1, %s9
    %p136 = scmp.lt.s32.totalorder %s9, 3
    %p137 = pnand %p135, %p136
    %p138 = pneg %p137
    // Predicated region
    $region9: #{convolution_forward.1} parent=5 // pred_check
      _
    $region10: #{convolution_forward.1} parent=5 // pred_check_branch
      %140 = sbr.rel (%p137) target = $region12
    $region11: #{convolution_forward.1} parent=5 // pred_region
      %s141 = ssub.s32 %s9, 1
      // Predicated region
      $region13: #{convolution_forward.1} parent=11 // pred_check
        %p142 = pneg %p73
      $region14: #{convolution_forward.1} parent=11 // pred_check_branch
        %144 = sbr.rel (%p142) target = $region16
      $region15: #{convolution_forward.1} parent=11 // pred_region
        %p145 = scmp.lt.s32.totalorder %s19, 0
        %s146 = scalar_select %p145, %s19, 0
        %s147 = smul.addr %s146, 4
        %s148 = scalar_lea.vmem %s1, %s147
      $region16: #{convolution_forward.1} parent=11 // pred_fallthru
        _
      // Predicated region
      $region17: #{convolution_forward.1} parent=11 // pred_check
        %p149 = pneg %p99
      $region18: #{convolution_forward.1} parent=11 // pred_check_branch
        %151 = sbr.rel (%p149) target = $region20
      $region19: #{convolution_forward.1} parent=11 // pred_region
        %p152 = scmp.lt.s32.totalorder %s19, 0
        %s153 = scalar_select %p152, %s19, 0
        %s154 = scalar_lea.vmem %s2, %s153
      $region20: #{convolution_forward.1} parent=11 // pred_fallthru
        _
    $region12: #{convolution_forward.1} parent=5 // pred_fallthru
      _
    %p155 = scmp.lt.s32.totalorder %s9, 2
    // Predicated region
    $region21: #{convolution_forward.1} parent=5 // pred_check
      %p156 = pneg %p155
    $region22: #{convolution_forward.1} parent=5 // pred_check_branch
      %158 = sbr.rel (%p156) target = $region24
    $region23: #{convolution_forward.1} parent=5 // pred_region
      // Predicated region
      $region25: #{convolution_forward.1} parent=23 // pred_check
        %p159 = pneg %p41
      $region26: #{convolution_forward.1} parent=23 // pred_check_branch
        %161 = sbr.rel (%p159) target = $region28
      $region27: #{convolution_forward.1} parent=23 // pred_region
        %s162 = smul.u32 32, %s16
        %p163 = scmp.lt.s32.totalorder %s162, 63
        %s164 = scalar_select %p163, %s162, 63
        %s165 = smul.addr %s164, 4
        %s166 = scalar_lea.vmem %s0, %s165
        %s167 = smul.u32 32, %s16
      $region28: #{convolution_forward.1} parent=23 // pred_fallthru
        _
    $region24: #{convolution_forward.1} parent=5 // pred_fallthru
      _
    %p168 = scmp.le.s32.totalorder 1, %s9
    %p169 = scmp.lt.s32.totalorder %s9, 3
    %p170 = pnand %p168, %p169
    %p171 = pneg %p170
    // Predicated region
    $region29: #{convolution_forward.1} parent=5 // pred_check
      _
    $region30: #{convolution_forward.1} parent=5 // pred_check_branch
      %173 = sbr.rel (%p170) target = $region32
    $region31: #{convolution_forward.1} parent=5 // pred_region
      %s174 = ssub.s32 %s9, 1
      %s175 = smul.u32 32, %s18
      %p176 = scmp.lt.s32.totalorder %s175, 63
      %s177 = scalar_select %p176, %s175, 63
      %s178 = smul.addr %s177, 4
      %s179 = scalar_lea.vmem %s0, %s178
      %p180 = pneg %p47
      %p181 = pneg %p44
      %p182 = scmp.lt.s32.totalorder %s19, 0
      %s183 = scalar_select %p182, %s19, 0
      %s184 = smul.addr %s183, 4
      %s185 = scalar_lea.vmem %s1, %s184
      %p186 = pneg %p73
      %p187 = pneg %p70
      %p188 = scmp.lt.s32.totalorder %s19, 0
      %s189 = scalar_select %p188, %s19, 0
      %s190 = scalar_lea.vmem %s2, %s189
      %p191 = pneg %p99
      %p192 = pneg %p96
      %p193 = pneg %p127
      %p194 = pneg %p124
      %s195 = smul.u32 32, %s18
      %p196 = scmp.lt.s32.totalorder %s195, 63
      %s197 = scalar_select %p196, %s195, 63
      %p198 = scmp.lt.s32.totalorder %s19, 0
      %s199 = scalar_select %p198, %s19, 0
      %s200 = sadd.s32 %s199, %s197
      %s201 = smul.addr %s200, 8
      %s202 = scalar_lea.vmem %s3, %s201
      %s203 = smul.u32 32, %s18
      %p204 = scmp.lt.s32.totalorder %s203, 63
      %s205 = scalar_select %p204, %s203, 63
      %s206 = smul.addr %s205, 4
      %s207 = scalar_lea.vmem %s0, %s206
      %s208 = smul.u32 32, %s18
      %p209 = scmp.lt.s32.totalorder %s19, 0
      %s210 = scalar_select %p209, %s19, 0
      %s211 = smul.addr %s210, 4
      %s212 = scalar_lea.vmem %s1, %s211
      %p213 = scmp.lt.s32.totalorder %s19, 0
      %s214 = scalar_select %p213, %s19, 0
      %s215 = scalar_lea.vmem %s2, %s214
      %s216 = smul.u32 32, %s18
      %p217 = scmp.lt.s32.totalorder %s216, 63
      %s218 = scalar_select %p217, %s216, 63
      %p219 = scmp.lt.s32.totalorder %s19, 0
      %s220 = scalar_select %p219, %s19, 0
      %s221 = sadd.s32 %s220, %s218
      %s222 = smul.addr %s221, 8
      %s223 = scalar_lea.vmem %s3, %s222
      %s224 = smul.u32 32, %s18
      %v226 = vld [vmem:[%s207] sm:$0xf]
      %v227 = vld [vmem:[%s207 + $0x4] sm:$0xf]
      %v228 = vld [vmem:[%s207 + $0x8] sm:$0xf]
      %v229 = vld [vmem:[%s207 + $0xc] sm:$0xf]
      %v230 = vld [vmem:[%s207 + $0x10] sm:$0xf]
      %v231 = vld [vmem:[%s207 + $0x14] sm:$0xf]
      %v232 = vld [vmem:[%s207 + $0x18] sm:$0xf]
      %v233 = vld [vmem:[%s207 + $0x1c] sm:$0xf]
      %v234 = vld [vmem:[%s207 + $0x20] sm:$0xf]
      %v235 = vld [vmem:[%s207 + $0x24] sm:$0xf]
      %v236 = vld [vmem:[%s207 + $0x28] sm:$0xf]
      %v237 = vld [vmem:[%s207 + $0x2c] sm:$0xf]
      %v238 = vld [vmem:[%s207 + $0x30] sm:$0xf]
      %v239 = vld [vmem:[%s207 + $0x34] sm:$0xf]
      %v240 = vld [vmem:[%s207 + $0x38] sm:$0xf]
      %v241 = vld [vmem:[%s207 + $0x3c] sm:$0xf]
      %v242 = vld [vmem:[%s207 + $0x40] sm:$0xf]
      %v243 = vld [vmem:[%s207 + $0x44] sm:$0xf]
      %v244 = vld [vmem:[%s207 + $0x48] sm:$0xf]
      %v245 = vld [vmem:[%s207 + $0x4c] sm:$0xf]
      %v246 = vld [vmem:[%s207 + $0x50] sm:$0xf]
      %v247 = vld [vmem:[%s207 + $0x54] sm:$0xf]
      %v248 = vld [vmem:[%s207 + $0x58] sm:$0xf]
      %v249 = vld [vmem:[%s207 + $0x5c] sm:$0xf]
      %v250 = vld [vmem:[%s207 + $0x60] sm:$0xf]
      %v251 = vld [vmem:[%s207 + $0x64] sm:$0xf]
      %v252 = vld [vmem:[%s207 + $0x68] sm:$0xf]
      %v253 = vld [vmem:[%s207 + $0x6c] sm:$0xf]
      %v254 = vld [vmem:[%s207 + $0x70] sm:$0xf]
      %v255 = vld [vmem:[%s207 + $0x74] sm:$0xf]
      %v256 = vld [vmem:[%s207 + $0x78] sm:$0xf]
      %v257 = vld [vmem:[%s207 + $0x7c] sm:$0xf]
      %v258 = vld [vmem:[%s212] sm:$0xf]
      %v259 = vld [vmem:[%s212 + $0x4] sm:$0xf]
      %v260 = vld [vmem:[%s212 + $0x8] sm:$0xf]
      %v261 = vld [vmem:[%s212 + $0xc] sm:$0xf]
      %v262 = vld [vmem:[%s212 + $0x10] sm:$0xf]
      %v263 = vld [vmem:[%s212 + $0x14] sm:$0xf]
      %v264 = vld [vmem:[%s212 + $0x18] sm:$0xf]
      %v265 = vld [vmem:[%s212 + $0x1c] sm:$0xf]
      %v266 = vld [vmem:[%s212 + $0x20] sm:$0xf]
      %v267 = vld [vmem:[%s212 + $0x24] sm:$0xf]
      %v268 = vld [vmem:[%s212 + $0x28] sm:$0xf]
      %v269 = vld [vmem:[%s212 + $0x2c] sm:$0xf]
      %v270 = vld [vmem:[%s212 + $0x30] sm:$0xf]
      %v271 = vld [vmem:[%s212 + $0x34] sm:$0xf]
      %v272 = vld [vmem:[%s212 + $0x38] sm:$0xf]
      %v273 = vld [vmem:[%s212 + $0x3c] sm:$0xf]
      %v274 = vld [vmem:[%s215] sm:$0x1]
      %v276 = vlaneseq
      %v277 = vshrl.u32 %v276, 7
      %v278 = vsub.s32 0, %v277
      %v279 = vrot.slane %v274, %v278
      %v313 = vunpack.c.l.b16 %v226
      %v314 = vunpack.c.l.b16 %v227
      %v315 = vunpack.c.l.b16 %v228
      %v316 = vunpack.c.l.b16 %v229
      %v317 = vunpack.c.l.b16 %v230
      %v318 = vunpack.c.l.b16 %v231
      %v319 = vunpack.c.l.b16 %v232
      %v320 = vunpack.c.l.b16 %v233
      %v321 = vunpack.c.l.b16 %v234
      %v322 = vunpack.c.l.b16 %v235
      %v323 = vunpack.c.l.b16 %v236
      %v324 = vunpack.c.l.b16 %v237
      %v325 = vunpack.c.l.b16 %v238
      %v326 = vunpack.c.l.b16 %v239
      %v327 = vunpack.c.l.b16 %v240
      %v328 = vunpack.c.l.b16 %v241
      %v329 = vunpack.c.l.b16 %v242
      %v330 = vunpack.c.l.b16 %v243
      %v331 = vunpack.c.l.b16 %v244
      %v332 = vunpack.c.l.b16 %v245
      %v333 = vunpack.c.l.b16 %v246
      %v334 = vunpack.c.l.b16 %v247
      %v335 = vunpack.c.l.b16 %v248
      %v336 = vunpack.c.l.b16 %v249
      %v337 = vunpack.c.l.b16 %v250
      %v338 = vunpack.c.l.b16 %v251
      %v339 = vunpack.c.l.b16 %v252
      %v340 = vunpack.c.l.b16 %v253
      %v341 = vunpack.c.l.b16 %v254
      %v342 = vunpack.c.l.b16 %v255
      %v343 = vunpack.c.l.b16 %v256
      %v344 = vunpack.c.l.b16 %v257
      %v345 = vpack.c.b16 %v314, %v313
      %v346 = vpack.c.b16 %v316, %v315
      %v347 = vpack.c.b16 %v318, %v317
      %v348 = vpack.c.b16 %v320, %v319
      %v349 = vpack.c.b16 %v322, %v321
      %v350 = vpack.c.b16 %v324, %v323
      %v351 = vpack.c.b16 %v326, %v325
      %v352 = vpack.c.b16 %v328, %v327
      %v353 = vpack.c.b16 %v330, %v329
      %v354 = vpack.c.b16 %v332, %v331
      %v355 = vpack.c.b16 %v334, %v333
      %v356 = vpack.c.b16 %v336, %v335
      %v357 = vpack.c.b16 %v338, %v337
      %v358 = vpack.c.b16 %v340, %v339
      %v359 = vpack.c.b16 %v342, %v341
      %v360 = vpack.c.b16 %v344, %v343
      %v393 = vunpack.c.l.b16 %v258
      %v394 = vunpack.c.l.b16 %v259
      %v395 = vunpack.c.l.b16 %v260
      %v396 = vunpack.c.l.b16 %v261
      %v397 = vunpack.c.l.b16 %v262
      %v398 = vunpack.c.l.b16 %v263
      %v399 = vunpack.c.l.b16 %v264
      %v400 = vunpack.c.l.b16 %v265
      %v401 = vunpack.c.l.b16 %v266
      %v402 = vunpack.c.l.b16 %v267
      %v403 = vunpack.c.l.b16 %v268
      %v404 = vunpack.c.l.b16 %v269
      %v405 = vunpack.c.l.b16 %v270
      %v406 = vunpack.c.l.b16 %v271
      %v407 = vunpack.c.l.b16 %v272
      %v408 = vunpack.c.l.b16 %v273
      %v409 = vpack.c.b16 %v394, %v393
      %v410 = vpack.c.b16 %v396, %v395
      %v411 = vpack.c.b16 %v398, %v397
      %v412 = vpack.c.b16 %v400, %v399
      %v413 = vpack.c.b16 %v402, %v401
      %v414 = vpack.c.b16 %v404, %v403
      %v415 = vpack.c.b16 %v406, %v405
      %v416 = vpack.c.b16 %v408, %v407
      %425 = vmatprep.subr.bf16.mxu0 0
      %426 = vmatpush1.bf16.msra.mxu0 %v409
      %427 = vmatprep.subr.bf16.mxu0 0
      %428 = vmatpush1.bf16.msra.mxu0 %v410
      %429 = vmatprep.subr.bf16.mxu0 0
      %430 = vmatpush1.bf16.msra.mxu0 %v411
      %431 = vmatprep.subr.bf16.mxu0 0
      %432 = vmatpush1.bf16.msra.mxu0 %v412
      %433 = vmatprep.subr.bf16.mxu0 0
      %434 = vmatpush1.bf16.msra.mxu0 %v413
      %435 = vmatprep.subr.bf16.mxu0 0
      %436 = vmatpush1.bf16.msra.mxu0 %v414
      %437 = vmatprep.subr.bf16.mxu0 0
      %438 = vmatpush1.bf16.msra.mxu0 %v415
      %439 = vmatprep.subr.bf16.mxu0 0
      %440 = vmatpush1.bf16.msra.mxu0 %v416
      %441 = vmatprep.subr.bf16.mxu0 0
      %442 = vmatpush1.bf16.msra.mxu0 0
      %443 = vmatprep.subr.bf16.mxu0 0
      %444 = vmatpush1.bf16.msra.mxu0 0
      %445 = vmatprep.subr.bf16.mxu0 0
      %446 = vmatpush1.bf16.msra.mxu0 0
      %447 = vmatprep.subr.bf16.mxu0 0
      %448 = vmatpush1.bf16.msra.mxu0 0
      %449 = vmatprep.subr.bf16.mxu0 0
      %450 = vmatpush1.bf16.msra.mxu0 0
      %451 = vmatprep.subr.bf16.mxu0 0
      %452 = vmatpush1.bf16.msra.mxu0 0
      %453 = vmatprep.subr.bf16.mxu0 0
      %454 = vmatpush1.bf16.msra.mxu0 0
      %455 = vmatprep.subr.bf16.mxu0 0
      %456 = vmatpush1.bf16.msra.mxu0 0
      %457 = vmatprep.mubr.bf16.mxu0 0
      %458 = vmatmul.mubr.bf16.gmra.mrb[0].mxu0 %v345
      %v459 = vpop.f32.mrb[0].mxu0
      %v460 = vadd.f32 %v279, %v459
      %v461 = vpop.f32.mrb[0].mxu0
      %v462 = vpop.f32.mrb[0].mxu0
      %v463 = vadd.f32 %v279, %v462
      %v464 = vpop.f32.mrb[0].mxu0
      %465 = vmatprep.mubr.bf16.mxu0 0
      %466 = vmatmul.mubr.bf16.gmra.mrb[0].mxu0 %v346
      %v467 = vpop.f32.mrb[0].mxu0
      %v468 = vadd.f32 %v279, %v467
      %v469 = vpop.f32.mrb[0].mxu0
      %v470 = vpop.f32.mrb[0].mxu0
      %v471 = vadd.f32 %v279, %v470
      %v472 = vpop.f32.mrb[0].mxu0
      %473 = vmatprep.mubr.bf16.mxu0 0
      %474 = vmatmul.mubr.bf16.gmra.mrb[0].mxu0 %v347
      %v475 = vpop.f32.mrb[0].mxu0
      %v476 = vadd.f32 %v279, %v475
      %v477 = vpop.f32.mrb[0].mxu0
      %v478 = vpop.f32.mrb[0].mxu0
      %v479 = vadd.f32 %v279, %v478
      %v480 = vpop.f32.mrb[0].mxu0
      %481 = vmatprep.mubr.bf16.mxu0 0
      %482 = vmatmul.mubr.bf16.gmra.mrb[0].mxu0 %v348
      %v483 = vpop.f32.mrb[0].mxu0
      %v484 = vadd.f32 %v279, %v483
      %v485 = vpop.f32.mrb[0].mxu0
      %v486 = vpop.f32.mrb[0].mxu0
      %v487 = vadd.f32 %v279, %v486
      %v488 = vpop.f32.mrb[0].mxu0
      %489 = vmatprep.mubr.bf16.mxu0 0
      %490 = vmatmul.mubr.bf16.gmra.mrb[0].mxu0 %v349
      %v491 = vpop.f32.mrb[0].mxu0
      %v492 = vadd.f32 %v279, %v491
      %v493 = vpop.f32.mrb[0].mxu0
      %v494 = vpop.f32.mrb[0].mxu0
      %v495 = vadd.f32 %v279, %v494
      %v496 = vpop.f32.mrb[0].mxu0
      %497 = vmatprep.mubr.bf16.mxu0 0
      %498 = vmatmul.mubr.bf16.gmra.mrb[0].mxu0 %v350
      %v499 = vpop.f32.mrb[0].mxu0
      %v500 = vadd.f32 %v279, %v499
      %v501 = vpop.f32.mrb[0].mxu0
      %v502 = vpop.f32.mrb[0].mxu0
      %v503 = vadd.f32 %v279, %v502
      %v504 = vpop.f32.mrb[0].mxu0
      %505 = vmatprep.mubr.bf16.mxu0 0
      %506 = vmatmul.mubr.bf16.gmra.mrb[0].mxu0 %v351
      %v507 = vpop.f32.mrb[0].mxu0
      %v508 = vadd.f32 %v279, %v507
      %v509 = vpop.f32.mrb[0].mxu0
      %v510 = vpop.f32.mrb[0].mxu0
      %v511 = vadd.f32 %v279, %v510
      %v512 = vpop.f32.mrb[0].mxu0
      %513 = vmatprep.mubr.bf16.mxu0 0
      %514 = vmatmul.mubr.bf16.gmra.mrb[0].mxu0 %v352
      %v515 = vpop.f32.mrb[0].mxu0
      %v516 = vadd.f32 %v279, %v515
      %v517 = vpop.f32.mrb[0].mxu0
      %v518 = vpop.f32.mrb[0].mxu0
      %v519 = vadd.f32 %v279, %v518
      %v520 = vpop.f32.mrb[0].mxu0
      %521 = vmatprep.mubr.bf16.mxu0 0
      %522 = vmatmul.mubr.bf16.gmra.mrb[0].mxu0 %v353
      %v523 = vpop.f32.mrb[0].mxu0
      %v524 = vadd.f32 %v279, %v523
      %v525 = vpop.f32.mrb[0].mxu0
      %v526 = vpop.f32.mrb[0].mxu0
      %v527 = vadd.f32 %v279, %v526
      %v528 = vpop.f32.mrb[0].mxu0
      %529 = vmatprep.mubr.bf16.mxu0 0
      %530 = vmatmul.mubr.bf16.gmra.mrb[0].mxu0 %v354
      %v531 = vpop.f32.mrb[0].mxu0
      %v532 = vadd.f32 %v279, %v531
      %v533 = vpop.f32.mrb[0].mxu0
      %v534 = vpop.f32.mrb[0].mxu0
      %v535 = vadd.f32 %v279, %v534
      %v536 = vpop.f32.mrb[0].mxu0
      %537 = vmatprep.mubr.bf16.mxu0 0
      %538 = vmatmul.mubr.bf16.gmra.mrb[0].mxu0 %v355
      %v539 = vpop.f32.mrb[0].mxu0
      %v540 = vadd.f32 %v279, %v539
      %v541 = vpop.f32.mrb[0].mxu0
      %v542 = vpop.f32.mrb[0].mxu0
      %v543 = vadd.f32 %v279, %v542
      %v544 = vpop.f32.mrb[0].mxu0
      %545 = vmatprep.mubr.bf16.mxu0 0
      %546 = vmatmul.mubr.bf16.gmra.mrb[0].mxu0 %v356
      %v547 = vpop.f32.mrb[0].mxu0
      %v548 = vadd.f32 %v279, %v547
      %v549 = vpop.f32.mrb[0].mxu0
      %v550 = vpop.f32.mrb[0].mxu0
      %v551 = vadd.f32 %v279, %v550
      %v552 = vpop.f32.mrb[0].mxu0
      %553 = vmatprep.mubr.bf16.mxu0 0
      %554 = vmatmul.mubr.bf16.gmra.mrb[0].mxu0 %v357
      %v555 = vpop.f32.mrb[0].mxu0
      %v556 = vadd.f32 %v279, %v555
      %v557 = vpop.f32.mrb[0].mxu0
      %v558 = vpop.f32.mrb[0].mxu0
      %v559 = vadd.f32 %v279, %v558
      %v560 = vpop.f32.mrb[0].mxu0
      %561 = vmatprep.mubr.bf16.mxu0 0
      %562 = vmatmul.mubr.bf16.gmra.mrb[0].mxu0 %v358
      %v563 = vpop.f32.mrb[0].mxu0
      %v564 = vadd.f32 %v279, %v563
      %v565 = vpop.f32.mrb[0].mxu0
      %v566 = vpop.f32.mrb[0].mxu0
      %v567 = vadd.f32 %v279, %v566
      %v568 = vpop.f32.mrb[0].mxu0
      %569 = vmatprep.mubr.bf16.mxu0 0
      %570 = vmatmul.mubr.bf16.gmra.mrb[0].mxu0 %v359
      %v571 = vpop.f32.mrb[0].mxu0
      %v572 = vadd.f32 %v279, %v571
      %v573 = vpop.f32.mrb[0].mxu0
      %v574 = vpop.f32.mrb[0].mxu0
      %v575 = vadd.f32 %v279, %v574
      %v576 = vpop.f32.mrb[0].mxu0
      %577 = vmatprep.mubr.bf16.mxu0 0
      %578 = vmatmul.mubr.bf16.gmra.mrb[0].mxu0 %v360
      %v579 = vpop.f32.mrb[0].mxu0
      %v580 = vadd.f32 %v279, %v579
      %v581 = vpop.f32.mrb[0].mxu0
      %v582 = vpop.f32.mrb[0].mxu0
      %v583 = vadd.f32 %v279, %v582
      %v584 = vpop.f32.mrb[0].mxu0
      %585 = vdwg.mxu0
      %v586 = vmax.f32 %v460, 0.0
      %v587 = vmax.f32 %v463, 0.0
      %v588 = vmax.f32 %v468, 0.0
      %v589 = vmax.f32 %v471, 0.0
      %v590 = vmax.f32 %v476, 0.0
      %v591 = vmax.f32 %v479, 0.0
      %v592 = vmax.f32 %v484, 0.0
      %v593 = vmax.f32 %v487, 0.0
      %v594 = vmax.f32 %v492, 0.0
      %v595 = vmax.f32 %v495, 0.0
      %v596 = vmax.f32 %v500, 0.0
      %v597 = vmax.f32 %v503, 0.0
      %v598 = vmax.f32 %v508, 0.0
      %v599 = vmax.f32 %v511, 0.0
      %v600 = vmax.f32 %v516, 0.0
      %v601 = vmax.f32 %v519, 0.0
      %v602 = vmax.f32 %v524, 0.0
      %v603 = vmax.f32 %v527, 0.0
      %v604 = vmax.f32 %v532, 0.0
      %v605 = vmax.f32 %v535, 0.0
      %v606 = vmax.f32 %v540, 0.0
      %v607 = vmax.f32 %v543, 0.0
      %v608 = vmax.f32 %v548, 0.0
      %v609 = vmax.f32 %v551, 0.0
      %v610 = vmax.f32 %v556, 0.0
      %v611 = vmax.f32 %v559, 0.0
      %v612 = vmax.f32 %v564, 0.0
      %v613 = vmax.f32 %v567, 0.0
      %v614 = vmax.f32 %v572, 0.0
      %v615 = vmax.f32 %v575, 0.0
      %v616 = vmax.f32 %v580, 0.0
      %v617 = vmax.f32 %v583, 0.0
      %618 = vst [vmem:[%s223] sm:$0xff] %v586
      %619 = vst [vmem:[%s223 + $0x8] sm:$0xff] %v587
      %620 = vst [vmem:[%s223 + $0x10] sm:$0xff] %v588
      %621 = vst [vmem:[%s223 + $0x18] sm:$0xff] %v589
      %622 = vst [vmem:[%s223 + $0x20] sm:$0xff] %v590
      %623 = vst [vmem:[%s223 + $0x28] sm:$0xff] %v591
      %624 = vst [vmem:[%s223 + $0x30] sm:$0xff] %v592
      %625 = vst [vmem:[%s223 + $0x38] sm:$0xff] %v593
      %626 = vst [vmem:[%s223 + $0x40] sm:$0xff] %v594
      %627 = vst [vmem:[%s223 + $0x48] sm:$0xff] %v595
      %628 = vst [vmem:[%s223 + $0x50] sm:$0xff] %v596
      %629 = vst [vmem:[%s223 + $0x58] sm:$0xff] %v597
      %630 = vst [vmem:[%s223 + $0x60] sm:$0xff] %v598
      %631 = vst [vmem:[%s223 + $0x68] sm:$0xff] %v599
      %632 = vst [vmem:[%s223 + $0x70] sm:$0xff] %v600
      %633 = vst [vmem:[%s223 + $0x78] sm:$0xff] %v601
      %634 = vst [vmem:[%s223 + $0x80] sm:$0xff] %v602
      %635 = vst [vmem:[%s223 + $0x88] sm:$0xff] %v603
      %636 = vst [vmem:[%s223 + $0x90] sm:$0xff] %v604
      %637 = vst [vmem:[%s223 + $0x98] sm:$0xff] %v605
      %638 = vst [vmem:[%s223 + $0xa0] sm:$0xff] %v606
      %639 = vst [vmem:[%s223 + $0xa8] sm:$0xff] %v607
      %640 = vst [vmem:[%s223 + $0xb0] sm:$0xff] %v608
      %641 = vst [vmem:[%s223 + $0xb8] sm:$0xff] %v609
      %642 = vst [vmem:[%s223 + $0xc0] sm:$0xff] %v610
      %643 = vst [vmem:[%s223 + $0xc8] sm:$0xff] %v611
      %644 = vst [vmem:[%s223 + $0xd0] sm:$0xff] %v612
      %645 = vst [vmem:[%s223 + $0xd8] sm:$0xff] %v613
      %646 = vst [vmem:[%s223 + $0xe0] sm:$0xff] %v614
      %647 = vst [vmem:[%s223 + $0xe8] sm:$0xff] %v615
      %648 = vst [vmem:[%s223 + $0xf0] sm:$0xff] %v616
      %649 = vst [vmem:[%s223 + $0xf8] sm:$0xff] %v617
      %s650 = smul.u32 32, %s18
      %p651 = scmp.lt.s32.totalorder %s650, 63
      %s652 = scalar_select %p651, %s650, 63
      %p653 = scmp.lt.s32.totalorder %s19, 0
      %s654 = scalar_select %p653, %s19, 0
      %s655 = sadd.s32 %s654, %s652
      %s656 = smul.addr %s655, 8
      %s657 = scalar_lea.vmem %s3, %s656
      // Predicated region
      $region33: #{convolution_forward.1} parent=31 // pred_check
        %p658 = pneg %p124
      $region34: #{convolution_forward.1} parent=31 // pred_check_branch
        %660 = sbr.rel (%p658) target = $region36
      $region35: #{convolution_forward.1} parent=31 // pred_region
        %s661 = smul.u32 32, %s18
      $region36: #{convolution_forward.1} parent=31 // pred_fallthru
        _
    $region32: #{convolution_forward.1} parent=5 // pred_fallthru
      _
    %p662 = scmp.le.s32.totalorder 2, %s9
    // Predicated region
    $region37: #{convolution_forward.1} parent=5 // pred_check
      %p663 = pneg %p662
    $region38: #{convolution_forward.1} parent=5 // pred_check_branch
      %665 = sbr.rel (%p663) target = $region40
    $region39: #{convolution_forward.1} parent=5 // pred_region
      %s666 = ssub.s32 %s9, 2
      // Predicated region
      $region41: #{convolution_forward.1} parent=39 // pred_check
        %p667 = pneg %p130
      $region42: #{convolution_forward.1} parent=39 // pred_check_branch
        %669 = sbr.rel (%p667) target = $region44
      $region43: #{convolution_forward.1} parent=39 // pred_region
        %s670 = smul.u32 32, %s20
        %p671 = scmp.lt.s32.totalorder %s670, 63
        %s672 = scalar_select %p671, %s670, 63
        %p673 = scmp.lt.s32.totalorder %s21, 0
        %s674 = scalar_select %p673, %s21, 0
        %s675 = sadd.s32 %s674, %s672
        %s676 = smul.addr %s675, 8
        %s677 = scalar_lea.vmem %s3, %s676
      $region44: #{convolution_forward.1} parent=39 // pred_fallthru
        _
    $region40: #{convolution_forward.1} parent=5 // pred_fallthru
      _
  $region6: #{convolution_forward.1} parent=0 // loop_footer
    %s13 = sadd.s32 1, %s9
  $region7: #{convolution_forward.1} parent=0 // loop_footer_branch
    %8 = sbr.rel target = $region3
  $region8: #{convolution_forward.1} parent=0 // loop_exit
    _

</llo_original>
